<compile_context>
chip_gen: v6e
topology: v6e:2x2x1
jax: 0.10.0
libtpu: 0.0.40
codegen_flags: <defaults>
</compile_context>

<pallas_src>
import functools

import numpy as np
import jax
import jax.numpy as jnp
from jax import lax
from jax.experimental import pallas as pl
from jax.experimental.pallas import tpu as pltpu


def _round_up(x: int, m: int) -> int:
    return ((x + m - 1) // m) * m


def _min_identity(dtype):
    """Identity element for `min` in this dtype (init + padding mask)."""
    dtype = jnp.dtype(dtype)
    if jnp.issubdtype(dtype, jnp.floating):
        return float("inf")
    if jnp.issubdtype(dtype, jnp.integer):
        return int(jnp.iinfo(dtype).max)
    raise TypeError(f"unsupported dtype for amin: {dtype}")


def _vmem_plan(itemsize: int):
    """Per-input-block element budget + scoped-VMEM limit, per chip generation."""
    try:
        vmem_phys = int(pltpu.get_tpu_info().vmem_capacity_bytes)
    except Exception:
        vmem_phys = 64 << 20  # conservative fallback (v7x per-TensorCore VMEM)
    # Request half of physical VMEM as the scoped limit; each input block uses
    # ~1/4 of that (2x double-buffered input + scratch accumulator + slack).
    limit = min(vmem_phys // 2, 64 << 20)
    block_bytes = limit // 4
    return block_bytes // itemsize, limit


# --------------------------------------------------------------------------
# Kernel A: reduction dim IS the last (contiguous) axis.
# Input block (TM, TK) over (M, K); lane-dense (TM, 128) VMEM accumulator.
# Output block (TM, 1) written only on the final K step.
# --------------------------------------------------------------------------
def _amin_lane_kernel(x_ref, o_ref, acc_ref, *, tk, fill, rem):
    k = pl.program_id(1)
    nk = pl.num_programs(1)

    @pl.when(k == 0)
    def _():
        acc_ref[...] = jnp.full(acc_ref.shape, fill, acc_ref.dtype)

    n_groups = tk // 128

    def fold(full_groups, partial_valid):
        x = x_ref[...]
        acc = acc_ref[...]
        for g in range(full_groups):  # pure VPU elementwise mins
            acc = jnp.minimum(acc, x[:, g * 128:(g + 1) * 128])
        if partial_valid:  # only the single partial 128-lane group gets masked
            g = full_groups
            sl = x[:, g * 128:(g + 1) * 128]
            lane = lax.broadcasted_iota(jnp.int32, sl.shape, 1)
            acc = jnp.minimum(acc, jnp.where(lane < partial_valid, sl, fill))
        acc_ref[...] = acc

    if rem == tk:  # K is a multiple of TK: never mask
        fold(n_groups, 0)
    else:
        @pl.when(k < nk - 1)
        def _():
            fold(n_groups, 0)

        @pl.when(k == nk - 1)
        def _():
            fold(rem // 128, rem % 128)

    @pl.when(k == nk - 1)
    def _():
        # Single cross-lane (XLU) reduce per output tile.
        o_ref[...] = jnp.min(acc_ref[...], axis=1, keepdims=True).astype(o_ref.dtype)


# --------------------------------------------------------------------------
# Kernel B: reduction dim is NOT the last axis.
# Input block (TP, TK, TN) over (pre, K, post); (TP, 8, TN) VMEM accumulator.
# Output block (TP, 1, TN) (lane-dense) written only on the final K step.
# --------------------------------------------------------------------------
def _amin_sublane_kernel(x_ref, o_ref, acc_ref, *, tk, fill, rem):
    k = pl.program_id(2)
    nk = pl.num_programs(2)

    @pl.when(k == 0)
    def _():
        acc_ref[...] = jnp.full(acc_ref.shape, fill, acc_ref.dtype)

    n_groups = tk // 8

    def fold(full_groups, partial_valid):
        x = x_ref[...]
        acc = acc_ref[...]
        for g in range(full_groups):  # elementwise mins of 8-sublane slabs
            acc = jnp.minimum(acc, x[:, g * 8:(g + 1) * 8, :])
        if partial_valid:  # only the single partial 8-sublane group gets masked
            g = full_groups
            sl = x[:, g * 8:(g + 1) * 8, :]
            row = lax.broadcasted_iota(jnp.int32, sl.shape, 1)
            acc = jnp.minimum(acc, jnp.where(row < partial_valid, sl, fill))
        acc_ref[...] = acc

    if rem == tk:
        fold(n_groups, 0)
    else:
        @pl.when(k < nk - 1)
        def _():
            fold(n_groups, 0)

        @pl.when(k == nk - 1)
        def _():
            fold(rem // 8, rem % 8)

    @pl.when(k == nk - 1)
    def _():
        # Single within-vreg 8->1 sublane reduce per output tile.
        o_ref[...] = jnp.min(acc_ref[...], axis=1, keepdims=True).astype(o_ref.dtype)


def pallas_amin(x: jax.Array, dim: int) -> jax.Array:
    """amin(x, dim) with the reduction executed in a tiled Pallas TPU kernel."""
    if x.dtype == jnp.bool_:
        # bool min == logical AND; Mosaic handles i32 reductions more robustly.
        return pallas_amin(x.astype(jnp.int32), dim).astype(jnp.bool_)

    dim = dim % x.ndim
    shape = x.shape
    out_shape_final = shape[:dim] + shape[dim + 1:]
    K = shape[dim]
    pre = int(np.prod(shape[:dim])) if dim > 0 else 1
    post = int(np.prod(shape[dim + 1:])) if dim < x.ndim - 1 else 1
    fill = _min_identity(x.dtype)
    itemsize = jnp.dtype(x.dtype).itemsize
    budget_elems, vmem_limit = _vmem_plan(itemsize)

    if post == 1:
        # ---- Lane path: reduce over the contiguous last axis, no transpose.
        M, K_eff, fold_rows = pre, K, 1
        # Tiny-M / huge-K: fold K into extra rows (min is associative) so the
        # kernel streams wide tiles and a parallel axis exists to shard.
        while M * fold_rows < 64 and K_eff % 2 == 0 and K_eff // 2 >= 1024:
            fold_rows *= 2
            K_eff //= 2
        M_eff = M * fold_rows
        x2 = x.reshape(M_eff, K_eff)

        TK = min(2048, _round_up(K_eff, 128))              # lane-aligned
        tm_budget = max(8, (budget_elems // TK) // 8 * 8)  # fit VMEM budget
        TM = min(_round_up(M_eff, 8), tm_budget)
        # Keep >= 2 blocks on the parallel axis when possible (v7x: 2 TCs).
        if pl.cdiv(M_eff, TM) < 2 and M_eff > 8:
            TM = _round_up((M_eff + 1) // 2, 8)

        nk = pl.cdiv(K_eff, TK)
        rem = K_eff - (nk - 1) * TK
        kernel = functools.partial(_amin_lane_kernel, tk=TK, fill=fill, rem=rem)

        out = pl.pallas_call(
            kernel,
            out_shape=jax.ShapeDtypeStruct((M_eff, 1), x.dtype),
            grid=(pl.cdiv(M_eff, TM), nk),
            in_specs=[pl.BlockSpec((TM, TK), lambda m, k: (m, k))],
            out_specs=pl.BlockSpec((TM, 1), lambda m, k: (m, 0)),
            scratch_shapes=[pltpu.VMEM((TM, 128), x.dtype)],
            compiler_params=pltpu.CompilerParams(
                dimension_semantics=("parallel", "arbitrary"),
                vmem_limit_bytes=vmem_limit,
            ),
        )(x2)

        out = out.reshape(M_eff)
        if fold_rows > 1:
            out = jnp.min(out.reshape(M, fold_rows), axis=1)
        return out.reshape(out_shape_final)

    # ---- Sublane path: reduce a middle axis; pure row-major reshape, lane-dense output.
    x3 = x.reshape(pre, K, post)
    TN = min(2048, _round_up(post, 128))     # lane-aligned, not capped small
    TK = min(256, _round_up(K, 8))           # sublane-aligned (bounded unroll)
    TP = max(1, min(pre, budget_elems // (TK * TN)))
    # Keep >= 2 blocks across the parallel axes when possible (v7x: 2 TCs).
    if pl.cdiv(pre, TP) * pl.cdiv(post, TN) < 2 and pre >= 2:
        TP = max(1, (pre + 1) // 2)

    nk = pl.cdiv(K, TK)
    rem = K - (nk - 1) * TK
    kernel = functools.partial(_amin_sublane_kernel, tk=TK, fill=fill, rem=rem)

    out = pl.pallas_call(
        kernel,
        out_shape=jax.ShapeDtypeStruct((pre, 1, post), x.dtype),
        grid=(pl.cdiv(pre, TP), pl.cdiv(post, TN), nk),
        in_specs=[pl.BlockSpec((TP, TK, TN), lambda p, n, k: (p, k, n))],
        out_specs=pl.BlockSpec((TP, 1, TN), lambda p, n, k: (p, 0, n)),
        scratch_shapes=[pltpu.VMEM((TP, 8, TN), x.dtype)],
        compiler_params=pltpu.CompilerParams(
            dimension_semantics=("parallel", "parallel", "arbitrary"),
            vmem_limit_bytes=vmem_limit,
        ),
    )(x3)
    return out.reshape(out_shape_final)


if __name__ == "__main__":
    key = jax.random.PRNGKey(0)

    # Mirrors Min.test_data plus larger cases exercising both kernel paths,
    # partial-tile masking, and multi-step K accumulation.
    cases = {
        "rank_1_dim_0": ((10,), 0),
        "rank_2_dim_1": ((2, 2), 1),
        "rank_4_dim_2": ((2, 2, 2, 2), 2),
        "rank_4_dim_3": ((2, 2, 2, 2), 3),
        "rank_3_mid_dim": ((4, 37, 200), 1),    # sublane path, ragged K & lanes
        "rank_3_last_dim": ((3, 5, 300), 2),    # lane path, ragged K
        "rank_2_multi_k": ((16, 3000), 1),      # lane path, multiple K steps
    }

    ok = True
    for name, (shape, dim) in cases.items():
        key, sub = jax.random.split(key)
        x = jax.random.uniform(sub, shape, dtype=jnp.float32)

        got = pallas_amin(x, dim)
        jax.block_until_ready(got)

        want = jnp.min(x, axis=dim)
        if got.shape != want.shape or not np.array_equal(
            np.asarray(got), np.asarray(want)
        ):
            ok = False
            print(f"MISMATCH in {name}: got {got}, want {want}")

    if ok:
        print("KERNEL_OK")
</pallas_src>

<mosaic_0001>
module attributes {stable_mosaic.version = 11 : i64} {
  func.func @_amin_lane_kernel(%arg0: i32, %arg1: i32, %arg2: memref<8x128xf32, #tpu.memory_space<vmem>>, %arg3: memref<8x1xf32, #tpu.memory_space<vmem>>, %arg4: memref<8x128xf32, #tpu.memory_space<vmem>>) attributes {dimension_semantics = [#tpu.dimension_semantics<parallel>, #tpu.dimension_semantics<arbitrary>], iteration_bounds = array<i64: 1, 1>, scalar_prefetch = 0 : i64, scratch_operands = 1 : i64, tpu.core_type = #tpu.core_type<tc>, window_params = [{transform_indices = @transform_0, window_bounds = array<i64: 8, 128>}, {transform_indices = @transform_1, window_bounds = array<i64: 8, 1>}]} {
    %c0_i32 = arith.constant 0 : i32
    %0 = arith.cmpi eq, %arg1, %c0_i32 : i32
    %1 = arith.extui %0 : i1 to i32
    %c0_i32_0 = arith.constant 0 : i32
    %2 = arith.cmpi ne, %1, %c0_i32_0 : i32
    scf.if %2 {
      %cst = arith.constant 0x7F800000 : f32
      %12 = vector.broadcast %cst : f32 to vector<8x128xf32>
      %c0 = arith.constant 0 : index
      %c0_7 = arith.constant 0 : index
      %13 = vector.load %arg4[%c0, %c0_7] : memref<8x128xf32, #tpu.memory_space<vmem>>, vector<8x128xf32>
      tpu.vector_store %arg4[%c0, %c0_7], %12 {strides = array<i32>} : memref<8x128xf32, #tpu.memory_space<vmem>>, vector<8x128xf32>,
    } else {
    }
    %c0_i32_1 = arith.constant 0 : i32
    %3 = arith.cmpi slt, %arg1, %c0_i32_1 : i32
    %4 = arith.extui %3 : i1 to i32
    %c0_i32_2 = arith.constant 0 : i32
    %5 = arith.cmpi ne, %4, %c0_i32_2 : i32
    scf.if %5 {
      %c0 = arith.constant 0 : index
      %c0_7 = arith.constant 0 : index
      %12 = vector.load %arg2[%c0, %c0_7] : memref<8x128xf32, #tpu.memory_space<vmem>>, vector<8x128xf32>
      %c0_8 = arith.constant 0 : index
      %c0_9 = arith.constant 0 : index
      %13 = vector.load %arg4[%c0_8, %c0_9] : memref<8x128xf32, #tpu.memory_space<vmem>>, vector<8x128xf32>
      %14 = arith.minimumf %13, %12 : vector<8x128xf32>
      %c0_10 = arith.constant 0 : index
      %c0_11 = arith.constant 0 : index
      %15 = vector.load %arg4[%c0_10, %c0_11] : memref<8x128xf32, #tpu.memory_space<vmem>>, vector<8x128xf32>
      tpu.vector_store %arg4[%c0_10, %c0_11], %14 {strides = array<i32>} : memref<8x128xf32, #tpu.memory_space<vmem>>, vector<8x128xf32>,
    } else {
    }
    %c0_i32_3 = arith.constant 0 : i32
    %6 = arith.cmpi eq, %arg1, %c0_i32_3 : i32
    %7 = arith.extui %6 : i1 to i32
    %c0_i32_4 = arith.constant 0 : i32
    %8 = arith.cmpi ne, %7, %c0_i32_4 : i32
    scf.if %8 {
      %c0 = arith.constant 0 : index
      %c0_7 = arith.constant 0 : index
      %12 = vector.load %arg2[%c0, %c0_7] : memref<8x128xf32, #tpu.memory_space<vmem>>, vector<8x128xf32>
      %c0_8 = arith.constant 0 : index
      %c0_9 = arith.constant 0 : index
      %13 = vector.load %arg4[%c0_8, %c0_9] : memref<8x128xf32, #tpu.memory_space<vmem>>, vector<8x128xf32>
      %14 = tpu.iota {dimensions = array<i32: 1>} : vector<8x128xi32>
      %c10_i32 = arith.constant 10 : i32
      %15 = vector.broadcast %c10_i32 : i32 to vector<8x128xi32>
      %16 = arith.cmpi slt, %14, %15 : vector<8x128xi32>
      %cst = arith.constant 0x7F800000 : f32
      %17 = vector.broadcast %cst : f32 to vector<8x128xf32>
      %18 = arith.select %16, %12, %17 : vector<8x128xi1>, vector<8x128xf32>
      %19 = arith.minimumf %13, %18 : vector<8x128xf32>
      %c0_10 = arith.constant 0 : index
      %c0_11 = arith.constant 0 : index
      %20 = vector.load %arg4[%c0_10, %c0_11] : memref<8x128xf32, #tpu.memory_space<vmem>>, vector<8x128xf32>
      tpu.vector_store %arg4[%c0_10, %c0_11], %19 {strides = array<i32>} : memref<8x128xf32, #tpu.memory_space<vmem>>, vector<8x128xf32>,
    } else {
    }
    %c0_i32_5 = arith.constant 0 : i32
    %9 = arith.cmpi eq, %arg1, %c0_i32_5 : i32
    %10 = arith.extui %9 : i1 to i32
    %c0_i32_6 = arith.constant 0 : i32
    %11 = arith.cmpi ne, %10, %c0_i32_6 : i32
    scf.if %11 {
      %c0 = arith.constant 0 : index
      %c0_7 = arith.constant 0 : index
      %12 = vector.load %arg4[%c0, %c0_7] : memref<8x128xf32, #tpu.memory_space<vmem>>, vector<8x128xf32>
      %cst = arith.constant dense<0x7F800000> : vector<8xf32>
      %13 = vector.multi_reduction <minimumf>, %12, %cst [1] : vector<8x128xf32> to vector<8xf32>
      %14 = vector.shape_cast %13 : vector<8xf32> to vector<8x1xf32>
      %c0_8 = arith.constant 0 : index
      %c0_9 = arith.constant 0 : index
      %15 = vector.load %arg3[%c0_8, %c0_9] : memref<8x1xf32, #tpu.memory_space<vmem>>, vector<8x1xf32>
      tpu.vector_store %arg3[%c0_8, %c0_9], %14 {strides = array<i32>} : memref<8x1xf32, #tpu.memory_space<vmem>>, vector<8x1xf32>,
    } else {
    }
    return
  }
  func.func @transform_0(%arg0: i32, %arg1: i32) -> (i32, i32) {
    %c0_i32 = arith.constant 0 : i32
    return %arg0, %arg1 : i32, i32
  }
  func.func @transform_1(%arg0: i32, %arg1: i32) -> (i32, i32) {
    %c0_i32 = arith.constant 0 : i32
    %c0_i32_0 = arith.constant 0 : i32
    return %arg0, %c0_i32 : i32, i32
  }
}

</mosaic_0001>

<llo_original>
// kernel: tpu_custom_call.1
$region0: #{tpu_custom_call.1}
  #allocation0 [shape = 'u32[]', space=smem, size = 0x4, offset = 0x4, fixed_abs, tag = 'smem constant byte address 0x4 - core index']
  #allocation1 [shape = 'u32[144,128]{1,0:T(1,128)}', space=vmem, size = 0x12000, scoped, tag = 'internal scratch']
  #allocation2 [shape = 'f32[8,128]{1,0:T(8,128)}', space=vmem, size = 0x1000, scoped, tag = 'scratch operand']
  %s0 = inlined_call_operand.hbm [shape: f32[1,10], index: 0, kind: input, shape index: {}]
  %s1 = inlined_call_operand.hbm [shape: f32[1,1], index: 1, kind: output, shape index: {}]
  %s2 = sld [smem:[#allocation0]]
  $region30: #{tpu_custom_call.1} parent=0
    _
  %s4 = ssub.s32 1, %s2
  %s5 = scalar_select 0, %s4, %s2
  $region1: #{tpu_custom_call.1} parent=0
    #allocation3 [shape = 'u8[4096]{0}', space=vmem, size = 0x1000, scoped, tag = 'input window, operand 0, single buffered']
    #allocation4 [shape = 's32[1]{0}', space=sflag, size = 0x4, scoped, tag = 'scoped memory for tpu_custom_call.1']
    #allocation5 [shape = 's32[1]{0}', space=sflag, size = 0x4, scoped, tag = 'scoped memory for tpu_custom_call.1']
    #allocation6 [shape = 'u8[4096]{0}', space=vmem, size = 0x1000, scoped, tag = 'output window, operand 0, single buffered']
    %6 = vsyncpa [#allocation4], 0
    %7 = vsyncpa [#allocation5], 0
    // Predicated region
    $region2: #{tpu_custom_call.1} parent=1 // pred_check
      _
    $region3: #{tpu_custom_call.1} parent=1 // pred_check_branch
      %9 = sbr.rel (0) target = $region5
    $region4: #{tpu_custom_call.1} parent=1 // pred_region
      %s11 = ssub.s32 128, 16
      %12 = vsyncadd [#allocation4], %s11
      %s13 = sshll.u32 [#allocation3], 4
      %s14 = int_to_ptr.vmem [resolvable:$true] %s13
      %19 = dma.hbm_to_vmem [thread:$0]  %s0, 16, %s14, [#allocation4], 16, 16, 1
    $region5: #{tpu_custom_call.1} parent=1 // pred_fallthru
      _
    // Predicated region
    $region6: #{tpu_custom_call.1} parent=1 // pred_check
      _
    $region7: #{tpu_custom_call.1} parent=1 // pred_check_branch
      %21 = sbr.rel (0) target = $region9
    $region8: #{tpu_custom_call.1} parent=1 // pred_region
      %22 = dma.done [#allocation4], 128
    $region9: #{tpu_custom_call.1} parent=1 // pred_fallthru
      _
    %p23 = scmp.eq.s32.totalorder 0, 0
    // Predicated region
    $region10: #{tpu_custom_call.1} parent=1 // pred_check
      %p24 = pneg %p23
    $region11: #{tpu_custom_call.1} parent=1 // pred_check_branch
      %26 = sbr.rel (%p24) target = $region13
    $region12: #{tpu_custom_call.1} parent=1 // pred_region
      %27 = vst [vmem:[#allocation2] sm:$0xff] inf
    $region13: #{tpu_custom_call.1} parent=1 // pred_fallthru
      _
    %p28 = scmp.lt.s32.totalorder 0, 0
    // Predicated region
    $region14: #{tpu_custom_call.1} parent=1 // pred_check
      %p29 = pneg %p28
    $region15: #{tpu_custom_call.1} parent=1 // pred_check_branch
      %31 = sbr.rel (%p29) target = $region17
    $region16: #{tpu_custom_call.1} parent=1 // pred_region
      %v32 = vld [vmem:[#allocation3] sm:$0xff]
      %v33 = vld [vmem:[#allocation2] sm:$0xff]
      %v34 = vmin.f32 %v33, %v32
      %35 = vst [vmem:[#allocation2] sm:$0xff] %v34
    $region17: #{tpu_custom_call.1} parent=1 // pred_fallthru
      _
    // Predicated region
    $region18: #{tpu_custom_call.1} parent=1 // pred_check
      %p36 = pneg %p23
    $region19: #{tpu_custom_call.1} parent=1 // pred_check_branch
      %38 = sbr.rel (%p36) target = $region21
    $region20: #{tpu_custom_call.1} parent=1 // pred_region
      %v39 = vld [vmem:[#allocation3] sm:$0xff]
      %v40 = vld [vmem:[#allocation2] sm:$0xff]
      %v41 = vlaneseq
      %v42 = vand.u32 %v41, 127
      %vm43 = vcmp.lt.s32.totalorder %v42, 10
      %v44 = vsel %vm43, %v39, inf
      %v45 = vmin.f32 %v40, %v44
      %46 = vst [vmem:[#allocation2] sm:$0xff] %v45
      %v47 = vld [vmem:[#allocation2] sm:$0xff]
      %48 = vmin.xlane.f32.xlu0 %v47
      %v49 = vpop.xlane.xlu0 %48
      %vm50 = vcmask 7168
      %51 = vst.msk [vmem:[#allocation6] sm:$0xff] %vm50, %v49
    $region21: #{tpu_custom_call.1} parent=1 // pred_fallthru
      _
    // Predicated region
    $region22: #{tpu_custom_call.1} parent=1 // pred_check
      _
    $region23: #{tpu_custom_call.1} parent=1 // pred_check_branch
      %53 = sbr.rel (0) target = $region25
    $region24: #{tpu_custom_call.1} parent=1 // pred_region
      %s55 = ssub.s32 128, 16
      %56 = vsyncadd [#allocation5], %s55
      %s57 = sshll.u32 [#allocation6], 4
      %s58 = int_to_ptr.vmem [resolvable:$true] %s57
      %63 = dma.vmem_to_hbm [thread:$0]  %s58, 16, %s1, [#allocation5], 16, 16, 1
    $region25: #{tpu_custom_call.1} parent=1 // pred_fallthru
      _
    // Predicated region
    $region26: #{tpu_custom_call.1} parent=1 // pred_check
      _
    $region27: #{tpu_custom_call.1} parent=1 // pred_check_branch
      %65 = sbr.rel (0) target = $region29
    $region28: #{tpu_custom_call.1} parent=1 // pred_region
      %66 = dma.done [#allocation5], 128
    $region29: #{tpu_custom_call.1} parent=1 // pred_fallthru
      _
    %67 = vsyncpa [#allocation4], 1
    %68 = vsyncpa [#allocation5], 1

</llo_original>
